<compile_context>
chip_gen: v7x
topology: tpu7x:2x2x1
jax: 0.10.0
libtpu: 0.0.40
codegen_flags: <defaults>
</compile_context>

<pallas_src>
import functools

import jax
import jax.numpy as jnp
from jax.experimental import pallas as pl
from jax.experimental.pallas import tpu as pltpu

_LANE = 128
_SUBLANE = 8
_ALIGN_ROWS = 16                      # bf16-friendly sublane multiple
_ALIGN_ELEMS = _ALIGN_ROWS * _LANE    # 2048 elements


def _bce_partial_kernel(pw_ref, x_ref, y_ref, out_ref, *, last_block_rows):
    """Per-block partial sum of BCE-with-logits; writes a dense (1, 8, 128) partial tile."""
    tm, lane = x_ref.shape

    x = x_ref[...].astype(jnp.float32)
    y = y_ref[...].astype(jnp.float32)
    pw_m1 = pw_ref[0] - 1.0           # scalar from SMEM, hoisted

    # PyTorch-stable BCEWithLogitsLoss with pos_weight:
    #   log_weight = 1 + (pos_weight - 1) * target
    #   loss = (1 - target) * input + log_weight * (log1p(exp(-|input|)) + max(-input, 0))
    softplus = jnp.log1p(jnp.exp(-jnp.abs(x))) + jnp.maximum(-x, 0.0)
    loss = (x - y * x) + (1.0 + pw_m1 * y) * softplus

    def _reduce(v):
        # Fold (tm, 128) down with VPU vreg adds to a single dense (8, 128) tile.
        return v.reshape(tm // _SUBLANE, _SUBLANE, lane).sum(axis=0).reshape(1, _SUBLANE, lane)

    if last_block_rows == tm:
        # Grid divides rows evenly: unmasked fast path on every block (static decision).
        out_ref[...] = _reduce(loss)
    else:
        # Only the ragged last block can contain out-of-bounds rows; gate the mask there.
        is_last = pl.program_id(0) == pl.num_programs(0) - 1

        @pl.when(is_last)
        def _():
            row = jax.lax.broadcasted_iota(jnp.int32, (tm, lane), 0)
            out_ref[...] = _reduce(jnp.where(row < last_block_rows, loss, 0.0))

        @pl.when(jnp.logical_not(is_last))
        def _():
            out_ref[...] = _reduce(loss)


def _loss_elems(x, y, pw_m1):
    sp = jnp.log1p(jnp.exp(-jnp.abs(x))) + jnp.maximum(-x, 0.0)
    return (x - y * x) + (1.0 + pw_m1 * y) * sp


def _stream_dtype(dt):
    # Stream bf16/f32 as-is (bf16 halves HBM traffic); anything else goes through f32.
    return dt if dt in (jnp.bfloat16, jnp.float32) else jnp.float32


def _pick_tile(rows, tm_max):
    tm_max = max(_ALIGN_ROWS, (tm_max // _ALIGN_ROWS) * _ALIGN_ROWS)
    if rows <= _ALIGN_ROWS:
        return rows
    if rows >= 2 * tm_max:
        return tm_max
    # Mid-size inputs: split into >=2 blocks so both v7x TensorCores issue DMAs.
    half = max(_ALIGN_ROWS, (rows // 2 // _ALIGN_ROWS) * _ALIGN_ROWS)
    return min(half, tm_max)


def flexible_bce_loss(inputs, targets, pos_weight, *, tm_max=8192):
    """BCEWithLogitsLoss(pos_weight=[pos_weight])(inputs, targets) with mean reduction."""
    x = inputs.reshape(-1).astype(_stream_dtype(inputs.dtype))
    y = targets.reshape(-1).astype(_stream_dtype(targets.dtype))
    n = x.shape[0]

    pw_arr = jnp.reshape(jnp.asarray(pos_weight, dtype=jnp.float32), (-1,))[:1]   # shape (1,)

    n_main = (n // _ALIGN_ELEMS) * _ALIGN_ELEMS
    rows = n_main // _LANE            # multiple of 16

    total = jnp.float32(0.0)

    if rows > 0:
        x2 = x[:n_main].reshape(rows, _LANE)   # zero-copy for aligned sizes
        y2 = y[:n_main].reshape(rows, _LANE)

        tm = _pick_tile(rows, tm_max)
        num_blocks = pl.cdiv(rows, tm)
        last_block_rows = rows - (num_blocks - 1) * tm

        kernel = functools.partial(_bce_partial_kernel, last_block_rows=last_block_rows)

        partials = pl.pallas_call(
            kernel,
            out_shape=jax.ShapeDtypeStruct((num_blocks, _SUBLANE, _LANE), jnp.float32),
            grid_spec=pltpu.PrefetchScalarGridSpec(
                num_scalar_prefetch=1,
                grid=(num_blocks,),
                in_specs=[
                    pl.BlockSpec((tm, _LANE), lambda i, pw_ref: (i, 0)),
                    pl.BlockSpec((tm, _LANE), lambda i, pw_ref: (i, 0)),
                ],
                out_specs=pl.BlockSpec((1, _SUBLANE, _LANE), lambda i, pw_ref: (i, 0, 0)),
            ),
            compiler_params=pltpu.CompilerParams(
                dimension_semantics=("parallel",),
                # 2 inputs x 2 buffers x 4 MiB (f32, tm=8192) = 16 MiB needs more than v5e's
                # 16 MiB default scope; 48 MiB stays below v7x's 64 MiB physical VMEM.
                vmem_limit_bytes=48 * 1024 * 1024,
            ),
        )(pw_arr, x2, y2)

        total = total + jnp.sum(partials)

    if n_main < n:
        # <= 2047-element unaligned tail: fold in with plain jnp (no full-array pad copy).
        x_tail = x[n_main:].astype(jnp.float32)
        y_tail = y[n_main:].astype(jnp.float32)
        total = total + jnp.sum(_loss_elems(x_tail, y_tail, pw_arr[0] - 1.0))

    return total / jnp.float32(n)


def _reference_loss(inputs, targets, pos_weight):
    x = inputs.astype(jnp.float32).reshape(-1)
    y = targets.astype(jnp.float32).reshape(-1)
    pw = jnp.float32(pos_weight)
    lw = 1.0 + (pw - 1.0) * y
    loss = (1.0 - y) * x + lw * (jnp.log1p(jnp.exp(-jnp.abs(x))) + jnp.maximum(-x, 0.0))
    return jnp.mean(loss)


if __name__ == "__main__":
    key = jax.random.PRNGKey(0)
    k1, k2, k3, k4, k5, k6 = jax.random.split(key, 6)

    pos_weight = 2.0  # the module holds pos_weight as a shape-[1] f32 tensor

    # Primary case: NCHW logits/targets, f32, size = multiple of 2048 (aligned, zero-copy).
    x = jax.random.normal(k1, (2, 4, 16, 16), dtype=jnp.float32)
    t = (jax.random.uniform(k2, (2, 4, 16, 16)) > 0.5).astype(jnp.float32)
    out = jax.block_until_ready(flexible_bce_loss(x, t, pos_weight))
    ref = _reference_loss(x, t, pos_weight)
    assert jnp.allclose(out, ref, rtol=1e-5, atol=1e-5), (out, ref)

    # bf16 streaming path (half the HBM traffic; f32 upcast happens on-vreg in the kernel).
    out_bf = jax.block_until_ready(
        flexible_bce_loss(x.astype(jnp.bfloat16), t.astype(jnp.bfloat16), pos_weight))
    ref_bf = _reference_loss(x.astype(jnp.bfloat16), t.astype(jnp.bfloat16), pos_weight)
    assert jnp.allclose(out_bf, ref_bf, rtol=1e-4, atol=1e-4), (out_bf, ref_bf)

    # Multi-block grid + ragged last block (pl.when mask path) + unaligned jnp tail.
    x_big = jax.random.normal(k3, (10540,), dtype=jnp.float32)
    t_big = (jax.random.uniform(k4, (10540,)) > 0.5).astype(jnp.float32)
    out_big = jax.block_until_ready(flexible_bce_loss(x_big, t_big, pos_weight, tm_max=32))
    ref_big = _reference_loss(x_big, t_big, pos_weight)
    assert jnp.allclose(out_big, ref_big, rtol=1e-5, atol=1e-5), (out_big, ref_big)

    # Tiny odd size (< 2048 elems): handled entirely by the jnp tail path.
    x_odd = jax.random.normal(k5, (2, 3, 7, 5), dtype=jnp.float32)
    t_odd = (jax.random.uniform(k6, (2, 3, 7, 5)) > 0.5).astype(jnp.float32)
    out_odd = jax.block_until_ready(flexible_bce_loss(x_odd, t_odd, pos_weight))
    ref_odd = _reference_loss(x_odd, t_odd, pos_weight)
    assert jnp.allclose(out_odd, ref_odd, rtol=1e-5, atol=1e-5), (out_odd, ref_odd)

    print("KERNEL_OK")
</pallas_src>

<mosaic_0001>
module attributes {stable_mosaic.version = 11 : i64} {
  func.func @_bce_partial_kernel(%arg0: i32, %arg1: memref<1xf32, #tpu.memory_space<smem>>, %arg2: memref<16x128xf32, #tpu.memory_space<vmem>>, %arg3: memref<16x128xf32, #tpu.memory_space<vmem>>, %arg4: memref<1x8x128xf32, #tpu.memory_space<vmem>>) attributes {dimension_semantics = [#tpu.dimension_semantics<parallel>], iteration_bounds = array<i64: 1>, scalar_prefetch = 1 : i64, scratch_operands = 0 : i64, tpu.core_type = #tpu.core_type<tc>, window_params = [{transform_indices = @transform_0, window_bounds = array<i64: 16, 128>}, {transform_indices = @transform_1, window_bounds = array<i64: 16, 128>}, {transform_indices = @transform_2, window_bounds = array<i64: 1, 8, 128>}]} {
    %c0 = arith.constant 0 : index
    %c0_0 = arith.constant 0 : index
    %0 = vector.load %arg2[%c0, %c0_0] : memref<16x128xf32, #tpu.memory_space<vmem>>, vector<16x128xf32>
    %c0_1 = arith.constant 0 : index
    %c0_2 = arith.constant 0 : index
    %1 = vector.load %arg3[%c0_1, %c0_2] : memref<16x128xf32, #tpu.memory_space<vmem>>, vector<16x128xf32>
    %c0_3 = arith.constant 0 : index
    %2 = memref.load %arg1[%c0_3] : memref<1xf32, #tpu.memory_space<smem>>
    %cst = arith.constant 1.000000e+00 : f32
    %3 = arith.subf %2, %cst : f32
    %4 = math.absf %0 : vector<16x128xf32>
    %cst_4 = arith.constant 0.000000e+00 : f32
    %5 = vector.broadcast %cst_4 : f32 to vector<16x128xf32>
    %6 = arith.subf %5, %4 : vector<16x128xf32>
    %7 = math.exp %6 : vector<16x128xf32>
    %8 = math.log1p %7 : vector<16x128xf32>
    %cst_5 = arith.constant 0.000000e+00 : f32
    %9 = vector.broadcast %cst_5 : f32 to vector<16x128xf32>
    %10 = arith.subf %9, %0 : vector<16x128xf32>
    %cst_6 = arith.constant 0.000000e+00 : f32
    %11 = vector.broadcast %cst_6 : f32 to vector<16x128xf32>
    %12 = arith.maximumf %10, %11 : vector<16x128xf32>
    %13 = arith.addf %8, %12 : vector<16x128xf32>
    %14 = arith.mulf %1, %0 : vector<16x128xf32>
    %15 = arith.subf %0, %14 : vector<16x128xf32>
    %16 = vector.broadcast %3 : f32 to vector<16x128xf32>
    %17 = arith.mulf %16, %1 : vector<16x128xf32>
    %cst_7 = arith.constant 1.000000e+00 : f32
    %18 = vector.broadcast %cst_7 : f32 to vector<16x128xf32>
    %19 = arith.addf %18, %17 : vector<16x128xf32>
    %20 = arith.mulf %19, %13 : vector<16x128xf32>
    %21 = arith.addf %15, %20 : vector<16x128xf32>
    %22 = vector.shape_cast %21 : vector<16x128xf32> to vector<2x8x128xf32>
    %cst_8 = arith.constant dense<0.000000e+00> : vector<8x128xf32>
    %23 = vector.multi_reduction <add>, %22, %cst_8 [0] : vector<2x8x128xf32> to vector<8x128xf32>
    %24 = vector.shape_cast %23 : vector<8x128xf32> to vector<1x8x128xf32>
    %c0_9 = arith.constant 0 : index
    %c0_10 = arith.constant 0 : index
    %c0_11 = arith.constant 0 : index
    %25 = vector.load %arg4[%c0_9, %c0_10, %c0_11] : memref<1x8x128xf32, #tpu.memory_space<vmem>>, vector<1x8x128xf32>
    tpu.vector_store %arg4[%c0_9, %c0_10, %c0_11], %24 {strides = array<i32>} : memref<1x8x128xf32, #tpu.memory_space<vmem>>, vector<1x8x128xf32>,
    return
  }
  func.func @transform_0(%arg0: i32, %arg1: memref<1xf32, #tpu.memory_space<smem>>) -> (i32, i32) {
    %c0_i32 = arith.constant 0 : i32
    %c0_i32_0 = arith.constant 0 : i32
    return %arg0, %c0_i32 : i32, i32
  }
  func.func @transform_1(%arg0: i32, %arg1: memref<1xf32, #tpu.memory_space<smem>>) -> (i32, i32) {
    %c0_i32 = arith.constant 0 : i32
    %c0_i32_0 = arith.constant 0 : i32
    return %arg0, %c0_i32 : i32, i32
  }
  func.func @transform_2(%arg0: i32, %arg1: memref<1xf32, #tpu.memory_space<smem>>) -> (i32, i32, i32) {
    %c0_i32 = arith.constant 0 : i32
    %c0_i32_0 = arith.constant 0 : i32
    %c0_i32_1 = arith.constant 0 : i32
    return %arg0, %c0_i32, %c0_i32_0 : i32, i32, i32
  }
}

</mosaic_0001>

<llo_original>
// kernel: tpu_custom_call.1
$region0: #{tpu_custom_call.1}
  #allocation0 [shape = 'u32[]', space=smem, size = 0x4, offset = 0x4, fixed_abs, tag = 'smem constant byte address 0x4 - core index']
  #allocation1 [shape = 'u32[144,128]{1,0:T(1,128)}', space=vmem, size = 0x12000, scoped, tag = 'internal scratch']
  #allocation2 [shape = 's32[1]{0}', space=sflag, size = 0x4, scoped, tag = 'scoped memory for tpu_custom_call.1']
  #allocation3 [shape = 'f32[1]{0:T(128)S(6)}', space=smem, size = 0x200, scoped, tag = 'prefetched SMEM operand 0']
  %s0 = inlined_call_operand.<no memory space> [shape: f32[1], index: 0, kind: input, shape index: {}]
  %s1 = inlined_call_operand.hbm [shape: f32[16,128], index: 1, kind: input, shape index: {}]
  %s2 = inlined_call_operand.hbm [shape: f32[16,128], index: 2, kind: input, shape index: {}]
  %s3 = inlined_call_operand.hbm [shape: f32[1,8,128], index: 3, kind: output, shape index: {}]
  %s4 = sld [smem:[#allocation0]]
  $region26: #{tpu_custom_call.1} parent=0
    _
  %s6 = ssub.s32 1, %s4
  %s7 = scalar_select 0, %s6, %s4
  %8 = sst [smem:[#allocation3]] %s0
  $region1: #{tpu_custom_call.1} parent=0
    #allocation4 [shape = 'u8[8192]{0}', space=vmem, size = 0x2000, scoped, tag = 'input window, operand 1, single buffered']
    #allocation5 [shape = 's32[1]{0}', space=sflag, size = 0x4, scoped, tag = 'scoped memory for tpu_custom_call.1']
    #allocation6 [shape = 's32[1]{0}', space=sflag, size = 0x4, scoped, tag = 'scoped memory for tpu_custom_call.1']
    #allocation7 [shape = 'u8[8192]{0}', space=vmem, size = 0x2000, scoped, tag = 'input window, operand 2, single buffered']
    #allocation8 [shape = 's32[1]{0}', space=sflag, size = 0x4, scoped, tag = 'scoped memory for tpu_custom_call.1']
    #allocation9 [shape = 'u8[4096]{0}', space=vmem, size = 0x1000, scoped, tag = 'output window, operand 0, single buffered']
    %9 = vsyncpa [#allocation5], 0
    %10 = vsyncpa [#allocation8], 0
    %11 = vsyncpa [#allocation6], 0
    // Predicated region
    $region2: #{tpu_custom_call.1} parent=1 // pred_check
      _
    $region3: #{tpu_custom_call.1} parent=1 // pred_check_branch
      %13 = sbr.rel (0) target = $region5
    $region4: #{tpu_custom_call.1} parent=1 // pred_region
      %s15 = ssub.s32 256, 256
      %16 = vsyncadd [#allocation5], %s15
      %s17 = sshll.u32 [#allocation4], 4
      %s18 = int_to_ptr.vmem [resolvable:$true] %s17
      %23 = dma.hbm_to_vmem [thread:$0]  %s1, 256, %s18, [#allocation5], 128, 128, 8
    $region5: #{tpu_custom_call.1} parent=1 // pred_fallthru
      _
    // Predicated region
    $region6: #{tpu_custom_call.1} parent=1 // pred_check
      _
    $region7: #{tpu_custom_call.1} parent=1 // pred_check_branch
      %25 = sbr.rel (0) target = $region9
    $region8: #{tpu_custom_call.1} parent=1 // pred_region
      %s27 = ssub.s32 256, 256
      %28 = vsyncadd [#allocation8], %s27
      %s29 = sshll.u32 [#allocation7], 4
      %s30 = int_to_ptr.vmem [resolvable:$true] %s29
      %35 = dma.hbm_to_vmem [thread:$0]  %s2, 256, %s30, [#allocation8], 128, 128, 8
    $region9: #{tpu_custom_call.1} parent=1 // pred_fallthru
      _
    // Predicated region
    $region10: #{tpu_custom_call.1} parent=1 // pred_check
      _
    $region11: #{tpu_custom_call.1} parent=1 // pred_check_branch
      %37 = sbr.rel (0) target = $region13
    $region12: #{tpu_custom_call.1} parent=1 // pred_region
      %38 = dma.done [#allocation5], 256
    $region13: #{tpu_custom_call.1} parent=1 // pred_fallthru
      _
    // Predicated region
    $region14: #{tpu_custom_call.1} parent=1 // pred_check
      _
    $region15: #{tpu_custom_call.1} parent=1 // pred_check_branch
      %40 = sbr.rel (0) target = $region17
    $region16: #{tpu_custom_call.1} parent=1 // pred_region
      %41 = dma.done [#allocation8], 256
    $region17: #{tpu_custom_call.1} parent=1 // pred_fallthru
      _
    %v42 = vld [vmem:[#allocation4] sm:$0xff]
    %v43 = vld [vmem:[#allocation4 + $0x8] sm:$0xff]
    %v44 = vld [vmem:[#allocation7] sm:$0xff]
    %v45 = vld [vmem:[#allocation7 + $0x8] sm:$0xff]
    %s46 = sld [smem:[#allocation3]]
    %s47 = ssub.f32 %s46, 1.0
    %v48 = vand.u32 2147483647, %v42
    %v49 = vand.u32 2147483647, %v43
    %v50 = vsub.f32 0.0, %v48
    %v51 = vsub.f32 0.0, %v49
    %v52 = vmul.f32 %v50, 1.442695
    %v53 = vpow.pop %v52
    %v54 = vmul.f32 %v51, 1.442695
    %v55 = vpow.pop %v54
    %v56 = vadd.f32 %v53, 1.0
    %v57 = vlog2.pop %v56
    %v58 = vmul.f32 %v57, 0.6931472
    %v59 = vmul.f32 -0.5, %v53
    %v60 = vadd.f32 %v59, 1.0
    %v61 = vmul.f32 %v60, %v53
    %v62 = vand.u32 2147483647, %v53
    %vm63 = vcmp.lt.f32.partialorder %v62, 0.0004427343
    %v64 = vsel %vm63, %v61, %v58
    %v65 = vadd.f32 %v55, 1.0
    %v66 = vlog2.pop %v65
    %v67 = vmul.f32 %v66, 0.6931472
    %v68 = vmul.f32 -0.5, %v55
    %v69 = vadd.f32 %v68, 1.0
    %v70 = vmul.f32 %v69, %v55
    %v71 = vand.u32 2147483647, %v55
    %vm72 = vcmp.lt.f32.partialorder %v71, 0.0004427343
    %v73 = vsel %vm72, %v70, %v67
    %v74 = vsub.f32 0.0, %v42
    %v75 = vsub.f32 0.0, %v43
    %v76 = vmax.f32 %v74, 0.0
    %v77 = vmax.f32 %v75, 0.0
    %v78 = vadd.f32 %v64, %v76
    %v79 = vadd.f32 %v73, %v77
    %v80 = vmul.f32 %v44, %v42
    %v81 = vmul.f32 %v45, %v43
    %v82 = vsub.f32 %v42, %v80
    %v83 = vsub.f32 %v43, %v81
    %v84 = vstv %s47
    %v85 = vmul.f32 %v84, %v44
    %v86 = vmul.f32 %v84, %v45
    %v87 = vadd.f32 %v85, 1.0
    %v88 = vadd.f32 %v86, 1.0
    %v89 = vmul.f32 %v87, %v78
    %v90 = vmul.f32 %v88, %v79
    %v91 = vadd.f32 %v82, %v89
    %v92 = vadd.f32 %v83, %v90
    %v93 = vadd.f32 %v91, %v92
    %94 = vst [vmem:[#allocation9] sm:$0xff] %v93
    // Predicated region
    $region18: #{tpu_custom_call.1} parent=1 // pred_check
      _
    $region19: #{tpu_custom_call.1} parent=1 // pred_check_branch
      %96 = sbr.rel (0) target = $region21
    $region20: #{tpu_custom_call.1} parent=1 // pred_region
      %s98 = ssub.s32 128, 128
      %99 = vsyncadd [#allocation6], %s98
      %s101 = sshll.u32 [#allocation9], 4
      %s102 = int_to_ptr.vmem [resolvable:$true] %s101
      %104 = dma.vmem_to_hbm [thread:$0]  %s102, 128, %s3, [#allocation6]
    $region21: #{tpu_custom_call.1} parent=1 // pred_fallthru
      _
    // Predicated region
    $region22: #{tpu_custom_call.1} parent=1 // pred_check
      _
    $region23: #{tpu_custom_call.1} parent=1 // pred_check_branch
      %106 = sbr.rel (0) target = $region25
    $region24: #{tpu_custom_call.1} parent=1 // pred_region
      %107 = dma.done [#allocation6], 128
    $region25: #{tpu_custom_call.1} parent=1 // pred_fallthru
      _
    %108 = vsyncpa [#allocation5], 1
    %109 = vsyncpa [#allocation8], 1
    %110 = vsyncpa [#allocation6], 1

</llo_original>
